<compile_context>
chip_gen: v5e
topology: v5e:2x2
jax: 0.10.0
libtpu: 0.0.40
codegen_flags: <defaults>
</compile_context>

<pallas_src>
import functools

import jax
import jax.numpy as jnp
from jax.experimental import pallas as pl
from jax.experimental.pallas import tpu as pltpu


_VMEM_LIMIT = 48 * 1024 * 1024          # explicit scoped-VMEM cap (fits v7x's 64 MiB)
_CHUNK_VMEM_BUDGET = 32 * 1024 * 1024   # target working set for the recurrence kernel


# ----------------------------------------------------------------------------
# Pallas kernels
# ----------------------------------------------------------------------------
def _proj_in_kernel(x_ref, wf_ref, wb_ref, bf_ref, bb_ref, pf_ref, pb_ref):
    """Layer-0 gate pre-activations, both directions: p = x @ W_ih.T + bias."""
    x = x_ref[...]
    pf = jnp.dot(x, wf_ref[...], preferred_element_type=jnp.float32) + bf_ref[...]
    pb = jnp.dot(x, wb_ref[...], preferred_element_type=jnp.float32) + bb_ref[...]
    pf_ref[...] = pf.astype(pf_ref.dtype)
    pb_ref[...] = pb.astype(pb_ref.dtype)


def _proj_hid_kernel(xf_ref, xb_ref, wff_ref, wbf_ref, wfb_ref, wbb_ref,
                     bf_ref, bb_ref, pf_ref, pb_ref):
    """Layer>=1 gate pre-activations from the previous layer's (fwd, bwd) halves."""
    xf = xf_ref[...]
    xb = xb_ref[...]
    pf = (jnp.dot(xf, wff_ref[...], preferred_element_type=jnp.float32)
          + jnp.dot(xb, wbf_ref[...], preferred_element_type=jnp.float32)
          + bf_ref[...])
    pb = (jnp.dot(xf, wfb_ref[...], preferred_element_type=jnp.float32)
          + jnp.dot(xb, wbb_ref[...], preferred_element_type=jnp.float32)
          + bb_ref[...])
    pf_ref[...] = pf.astype(pf_ref.dtype)
    pb_ref[...] = pb.astype(pb_ref.dtype)


def _fc_kernel(xf_ref, xb_ref, wf_ref, wb_ref, b_ref, o_ref):
    """fc_out applied to (fwd, bwd) halves without materializing a concat."""
    o = (jnp.dot(xf_ref[...], wf_ref[...], preferred_element_type=jnp.float32)
         + jnp.dot(xb_ref[...], wb_ref[...], preferred_element_type=jnp.float32)
         + b_ref[...])
    o_ref[...] = o.astype(o_ref.dtype)


def _lstm_cell(gates, h_prev, c_prev, t_act, lens, hd):
    """Standard LSTM cell (gate order i, f, g, o) with packed-sequence masking."""
    i_g = jax.nn.sigmoid(gates[:, 0 * hd:1 * hd])
    f_g = jax.nn.sigmoid(gates[:, 1 * hd:2 * hd])
    g_g = jnp.tanh(gates[:, 2 * hd:3 * hd])
    o_g = jax.nn.sigmoid(gates[:, 3 * hd:4 * hd])
    c_new = f_g * c_prev + i_g * g_g
    h_new = o_g * jnp.tanh(c_new)
    valid = t_act < lens                               # (bt, 1), broadcasts
    return (jnp.where(valid, h_new, h_prev),
            jnp.where(valid, c_new, c_prev),
            jnp.where(valid, h_new, jnp.zeros_like(h_new)))


def _bilstm_chunk_kernel(pf_ref, pb_ref, lens_ref, whf_ref, whb_ref,
                         yf_ref, yb_ref, hf_scr, cf_scr, hb_scr, cb_scr,
                         *, seq_len, chunk):
    """Fused fwd+bwd LSTM recurrence over one time chunk (time-major layout).

    pf_ref : (ct, bt, 4*Hd) bf16  fwd gate pre-activations, time chunk ci
    pb_ref : (ct, bt, 4*Hd) bf16  bwd gate pre-activations, time chunk NC-1-ci
    lens   : (bt, 1) int32        per-example valid lengths
    whf/whb: (Hd, 4*Hd) bf16      fused recurrent weights (resident in VMEM)
    yf/yb  : (ct, bt, Hd) bf16    outputs for the same chunks
    scratch: (bt, Hd) f32 x4      carried h/c per direction (persist over chunks)
    """
    ci = pl.program_id(1)

    @pl.when(ci == 0)
    def _():
        hf_scr[...] = jnp.zeros_like(hf_scr)
        cf_scr[...] = jnp.zeros_like(cf_scr)
        hb_scr[...] = jnp.zeros_like(hb_scr)
        cb_scr[...] = jnp.zeros_like(cb_scr)

    lens = lens_ref[...]                               # (bt, 1)
    whf = whf_ref[...]
    whb = whb_ref[...]
    hd = hf_scr.shape[-1]

    h_f, c_f = hf_scr[...], cf_scr[...]
    h_b, c_b = hb_scr[...], cb_scr[...]

    base = ci * chunk
    for s in range(chunk):                             # static: chunk <= 32
        # ---- forward direction: actual time t = base + s ----
        gf = (pf_ref[s, :, :].astype(jnp.float32)
              + jnp.dot(h_f.astype(jnp.bfloat16), whf,
                        preferred_element_type=jnp.float32))
        h_f, c_f, y_f = _lstm_cell(gf, h_f, c_f, base + s, lens, hd)
        yf_ref[s, :, :] = y_f.astype(yf_ref.dtype)
        # ---- backward direction: actual time t = seq_len - 1 - (base + s) ----
        sb = chunk - 1 - s
        gb = (pb_ref[sb, :, :].astype(jnp.float32)
              + jnp.dot(h_b.astype(jnp.bfloat16), whb,
                        preferred_element_type=jnp.float32))
        h_b, c_b, y_b = _lstm_cell(gb, h_b, c_b, seq_len - 1 - (base + s),
                                   lens, hd)
        yb_ref[sb, :, :] = y_b.astype(yb_ref.dtype)

    hf_scr[...], cf_scr[...] = h_f, c_f
    hb_scr[...], cb_scr[...] = h_b, c_b


# ----------------------------------------------------------------------------
# Tiling helpers
# ----------------------------------------------------------------------------
def _pick_row_tile(m):
    """Row tile for M-tiled matmuls; chosen to divide M (no HBM pad/concat)."""
    for tm in (512, 256, 128, 64, 32, 16, 8):
        if m % tm == 0:
            return tm
    return m                                           # odd/small M: one full block


def _pick_gate_tile(g):
    """Gate-column tile so large projection weights stay bounded in VMEM."""
    for tg in (1024, 512, 256, 128):
        if g % tg == 0:
            return tg
    return g


def _pick_time_chunk(t):
    """Time chunk (<= 32, statically unrolled) and padded sequence length."""
    for ct in (32, 16, 8):
        if t % ct == 0:
            return ct, t
    if t < 8:
        return t, t
    ct = 8
    return ct, ((t + ct - 1) // ct) * ct               # padded steps are masked


def _pick_batch_tile(b, ct, g, hd):
    """Largest 8-aligned batch tile that fits the VMEM budget; keep >= 2 batch
    tiles when B permits so the 'parallel' axis can use both v7x TensorCores."""
    weights = 2 * hd * g * 2                           # both W_hh (bf16), resident

    def vmem(bt):
        return (weights
                + 2 * 2 * ct * bt * g * 2              # pf/pb blocks, double-buffered
                + 2 * 2 * ct * bt * hd * 2             # yf/yb blocks, double-buffered
                + 4 * bt * hd * 4)                     # f32 h/c scratch

    for bt in (256, 128, 64, 32, 16, 8):
        if (bt <= b and b % bt == 0 and vmem(bt) <= _CHUNK_VMEM_BUDGET
                and (b // bt >= 2 or b < 16)):
            return bt
    return 8 if (b >= 8 and b % 8 == 0) else b


# ----------------------------------------------------------------------------
# pallas_call wrappers
# ----------------------------------------------------------------------------
def _project_input(x2d, wf, wb, bf, bb):
    m, fin = x2d.shape
    g = wf.shape[1]
    tm = _pick_row_tile(m)
    tg = _pick_gate_tile(g)
    cost = pl.CostEstimate(
        flops=2 * 2 * m * fin * g, transcendentals=0,
        bytes_accessed=(m * fin + 2 * fin * g + 2 * m * g) * 2 + 2 * g * 4)
    return pl.pallas_call(
        _proj_in_kernel,
        grid_spec=pltpu.PrefetchScalarGridSpec(
            num_scalar_prefetch=0,
            grid=(m // tm, g // tg),
            in_specs=[
                pl.BlockSpec((tm, fin), lambda i, j: (i, 0)),
                pl.BlockSpec((fin, tg), lambda i, j: (0, j)),
                pl.BlockSpec((fin, tg), lambda i, j: (0, j)),
                pl.BlockSpec((1, tg), lambda i, j: (0, j)),
                pl.BlockSpec((1, tg), lambda i, j: (0, j)),
            ],
            out_specs=[
                pl.BlockSpec((tm, tg), lambda i, j: (i, j)),
                pl.BlockSpec((tm, tg), lambda i, j: (i, j)),
            ],
        ),
        out_shape=(jax.ShapeDtypeStruct((m, g), jnp.bfloat16),
                   jax.ShapeDtypeStruct((m, g), jnp.bfloat16)),
        compiler_params=pltpu.CompilerParams(
            dimension_semantics=("parallel", "parallel"),
            vmem_limit_bytes=_VMEM_LIMIT),
        cost_estimate=cost,
    )(x2d, wf, wb, bf, bb)


def _project_hidden(xf2d, xb2d, wff, wbf, wfb, wbb, bf, bb):
    m, hd = xf2d.shape
    g = wff.shape[1]
    tm = _pick_row_tile(m)
    tg = _pick_gate_tile(g)
    cost = pl.CostEstimate(
        flops=2 * 4 * m * hd * g, transcendentals=0,
        bytes_accessed=(2 * m * hd + 4 * hd * g + 2 * m * g) * 2 + 2 * g * 4)
    return pl.pallas_call(
        _proj_hid_kernel,
        grid_spec=pltpu.PrefetchScalarGridSpec(
            num_scalar_prefetch=0,
            grid=(m // tm, g // tg),
            in_specs=[
                pl.BlockSpec((tm, hd), lambda i, j: (i, 0)),
                pl.BlockSpec((tm, hd), lambda i, j: (i, 0)),
                pl.BlockSpec((hd, tg), lambda i, j: (0, j)),
                pl.BlockSpec((hd, tg), lambda i, j: (0, j)),
                pl.BlockSpec((hd, tg), lambda i, j: (0, j)),
                pl.BlockSpec((hd, tg), lambda i, j: (0, j)),
                pl.BlockSpec((1, tg), lambda i, j: (0, j)),
                pl.BlockSpec((1, tg), lambda i, j: (0, j)),
            ],
            out_specs=[
                pl.BlockSpec((tm, tg), lambda i, j: (i, j)),
                pl.BlockSpec((tm, tg), lambda i, j: (i, j)),
            ],
        ),
        out_shape=(jax.ShapeDtypeStruct((m, g), jnp.bfloat16),
                   jax.ShapeDtypeStruct((m, g), jnp.bfloat16)),
        compiler_params=pltpu.CompilerParams(
            dimension_semantics=("parallel", "parallel"),
            vmem_limit_bytes=_VMEM_LIMIT),
        cost_estimate=cost,
    )(xf2d, xb2d, wff, wbf, wfb, wbb, bf, bb)


def _fc_out(xf2d, xb2d, wf, wb, b):
    m, hd = xf2d.shape
    o = wf.shape[1]
    tm = _pick_row_tile(m)
    cost = pl.CostEstimate(
        flops=2 * 2 * m * hd * o, transcendentals=0,
        bytes_accessed=(2 * m * hd + 2 * hd * o) * 2 + (m * o + o) * 4)
    return pl.pallas_call(
        _fc_kernel,
        grid_spec=pltpu.PrefetchScalarGridSpec(
            num_scalar_prefetch=0,
            grid=(m // tm,),
            in_specs=[
                pl.BlockSpec((tm, hd), lambda i: (i, 0)),
                pl.BlockSpec((tm, hd), lambda i: (i, 0)),
                pl.BlockSpec((hd, o), lambda i: (0, 0)),
                pl.BlockSpec((hd, o), lambda i: (0, 0)),
                pl.BlockSpec((1, o), lambda i: (0, 0)),
            ],
            out_specs=pl.BlockSpec((tm, o), lambda i: (i, 0)),
        ),
        out_shape=jax.ShapeDtypeStruct((m, o), jnp.float32),
        compiler_params=pltpu.CompilerParams(
            dimension_semantics=("parallel",),
            vmem_limit_bytes=_VMEM_LIMIT),
        cost_estimate=cost,
    )(xf2d, xb2d, wf, wb, b)


def bilstm_layer(pf, pb, lens2d, whf, whb, *, chunk):
    """pf/pb: (T, B, 4*Hd) bf16 pre-activations -> (yf, yb): (T, B, Hd) bf16."""
    T, B, G = pf.shape
    hd = whf.shape[0]
    ct = chunk
    nc = T // ct
    bt = _pick_batch_tile(B, ct, G, hd)
    nb = B // bt

    kernel = functools.partial(_bilstm_chunk_kernel, seq_len=T, chunk=ct)

    steps = 2 * T * B
    cost = pl.CostEstimate(
        flops=steps * 2 * hd * G + steps * 10 * G,
        transcendentals=steps * G,
        bytes_accessed=(2 * T * B * G + 2 * T * B * hd + 2 * hd * G) * 2 + B * 4)

    grid_spec = pltpu.PrefetchScalarGridSpec(
        num_scalar_prefetch=0,
        grid=(nb, nc),
        in_specs=[
            pl.BlockSpec((ct, bt, G), lambda b, c: (c, b, 0)),           # fwd pre
            pl.BlockSpec((ct, bt, G), lambda b, c: (nc - 1 - c, b, 0)),  # bwd pre
            pl.BlockSpec((bt, 1), lambda b, c: (b, 0)),                  # lengths
            pl.BlockSpec((hd, G), lambda b, c: (0, 0)),                  # W_hh fwd
            pl.BlockSpec((hd, G), lambda b, c: (0, 0)),                  # W_hh bwd
        ],
        out_specs=[
            pl.BlockSpec((ct, bt, hd), lambda b, c: (c, b, 0)),
            pl.BlockSpec((ct, bt, hd), lambda b, c: (nc - 1 - c, b, 0)),
        ],
        scratch_shapes=[pltpu.VMEM((bt, hd), jnp.float32)] * 4,
    )

    return pl.pallas_call(
        kernel,
        grid_spec=grid_spec,
        out_shape=(jax.ShapeDtypeStruct((T, B, hd), jnp.bfloat16),
                   jax.ShapeDtypeStruct((T, B, hd), jnp.bfloat16)),
        compiler_params=pltpu.CompilerParams(
            # batch tiles are independent ("parallel" -> second TC on v7x);
            # the time-chunk axis carries the recurrent state -> "arbitrary".
            dimension_semantics=("parallel", "arbitrary"),
            vmem_limit_bytes=_VMEM_LIMIT),
        cost_estimate=cost,
    )(pf, pb, lens2d, whf, whb)


# ----------------------------------------------------------------------------
# Parameters & forward
# ----------------------------------------------------------------------------
def init_params(key, input_size, hidden_size, output_size, num_layers,
                bidirectional=True):
    assert bidirectional, "only the module default (bidirectional=True) is implemented"
    hd = hidden_size // 2
    k = 1.0 / float(hd) ** 0.5
    keys = iter(jax.random.split(key, num_layers * 2 * 4 + 2))

    layers = []
    for layer in range(num_layers):
        in_feat = input_size if layer == 0 else hidden_size
        dirs = []
        for _ in range(2):                               # forward, backward
            w_ih = jax.random.uniform(next(keys), (4 * hd, in_feat),
                                      jnp.float32, -k, k)
            w_hh = jax.random.uniform(next(keys), (4 * hd, hd),
                                      jnp.float32, -k, k)
            b_ih = jax.random.uniform(next(keys), (4 * hd,), jnp.float32, -k, k)
            b_hh = jax.random.uniform(next(keys), (4 * hd,), jnp.float32, -k, k)
            w_ih_t = w_ih.T.astype(jnp.bfloat16)         # (in_feat, 4*hd), gates i,f,g,o
            d = {"w_hh_t": w_hh.T.astype(jnp.bfloat16),  # (hd, 4*hd)
                 "bias": (b_ih + b_hh).reshape(1, 4 * hd)}               # f32
            if layer == 0:
                d["w_ih_t"] = w_ih_t
            else:
                # previous layer output is [h_fwd | h_bwd]; split on input dim
                d["w_ih_from_f"] = w_ih_t[:hd]
                d["w_ih_from_b"] = w_ih_t[hd:]
            dirs.append(d)
        layers.append(dirs)

    kf = 1.0 / float(hidden_size) ** 0.5
    fc_w = jax.random.uniform(next(keys), (output_size, hidden_size),
                              jnp.float32, -kf, kf)
    fc_b = jax.random.uniform(next(keys), (output_size,), jnp.float32, -kf, kf)
    fc_w_t = fc_w.T.astype(jnp.bfloat16)                 # (hidden_size, output_size)
    return {"layers": layers,
            "fc_w_f": fc_w_t[:hd],
            "fc_w_b": fc_w_t[hd:],
            "fc_b": fc_b.reshape(1, output_size)}


def autoregressive_encoder_forward(params, input_seq, input_lengths):
    """Non-autoregressive path of AutoregressiveEncoder.forward (eval mode).

    input_seq: (B, T, input_size); input_lengths: (B,) int.
    Returns (B, T, output_size); trim to max(input_lengths) to match
    pad_packed_sequence exactly.
    """
    B, T, _ = input_seq.shape
    lens2d = input_lengths.astype(jnp.int32).reshape(B, 1)

    ct, t_pad = _pick_time_chunk(T)
    # Time-major layout (T, B, F): per-step recurrence accesses are full slabs.
    x_tm = jnp.transpose(input_seq.astype(jnp.bfloat16), (1, 0, 2))
    if t_pad != T:
        # Extra steps are masked (frozen state, zero output) inside the kernel.
        x_tm = jnp.concatenate(
            [x_tm, jnp.zeros((t_pad - T,) + x_tm.shape[1:], x_tm.dtype)], axis=0)
    x2d = x_tm.reshape(t_pad * B, -1)

    yf2d = yb2d = None
    for li, (fwd_p, bwd_p) in enumerate(params["layers"]):
        if li == 0:
            pf, pb = _project_input(x2d,
                                    fwd_p["w_ih_t"], bwd_p["w_ih_t"],
                                    fwd_p["bias"], bwd_p["bias"])
        else:
            pf, pb = _project_hidden(yf2d, yb2d,
                                     fwd_p["w_ih_from_f"], fwd_p["w_ih_from_b"],
                                     bwd_p["w_ih_from_f"], bwd_p["w_ih_from_b"],
                                     fwd_p["bias"], bwd_p["bias"])
        g = pf.shape[-1]
        yf, yb = bilstm_layer(pf.reshape(t_pad, B, g), pb.reshape(t_pad, B, g),
                              lens2d, fwd_p["w_hh_t"], bwd_p["w_hh_t"],
                              chunk=ct)
        hd = yf.shape[-1]
        yf2d = yf.reshape(t_pad * B, hd)
        yb2d = yb.reshape(t_pad * B, hd)

    # dropout: identity (eval mode)
    y2d = _fc_out(yf2d, yb2d, params["fc_w_f"], params["fc_w_b"], params["fc_b"])
    y = y2d.reshape(t_pad, B, -1)[:T]                   # drop time padding
    return jnp.transpose(y, (1, 0, 2))                  # back to batch-first


# ----------------------------------------------------------------------------
# Pure-JAX f32 reference (same math, no Pallas) for a self-check
# ----------------------------------------------------------------------------
def _reference_forward(params, input_seq, input_lengths):
    B, T, _ = input_seq.shape
    lens = input_lengths.astype(jnp.int32).reshape(B, 1)
    # The kernel quantizes the input to bf16; mirror that representation.
    x = input_seq.astype(jnp.bfloat16).astype(jnp.float32)
    f32 = lambda a: jnp.asarray(a, jnp.float32)

    def run_dir(pre, w_hh_t, reverse):
        hd = w_hh_t.shape[0]
        h = jnp.zeros((B, hd), jnp.float32)
        c = jnp.zeros((B, hd), jnp.float32)
        ys = [None] * T
        order = range(T - 1, -1, -1) if reverse else range(T)
        for t in order:
            gg = pre[:, t, :] + h @ f32(w_hh_t)
            i_g = jax.nn.sigmoid(gg[:, :hd])
            f_g = jax.nn.sigmoid(gg[:, hd:2 * hd])
            g_g = jnp.tanh(gg[:, 2 * hd:3 * hd])
            o_g = jax.nn.sigmoid(gg[:, 3 * hd:])
            c_new = f_g * c + i_g * g_g
            h_new = o_g * jnp.tanh(c_new)
            valid = t < lens
            h = jnp.where(valid, h_new, h)
            c = jnp.where(valid, c_new, c)
            ys[t] = jnp.where(valid, h_new, 0.0)
        return jnp.stack(ys, axis=1)

    yf = yb = None
    for li, (fp, bp) in enumerate(params["layers"]):
        if li == 0:
            pre_f = jnp.einsum("btf,fg->btg", x, f32(fp["w_ih_t"])) + fp["bias"]
            pre_b = jnp.einsum("btf,fg->btg", x, f32(bp["w_ih_t"])) + bp["bias"]
        else:
            pre_f = (jnp.einsum("bth,hg->btg", yf, f32(fp["w_ih_from_f"]))
                     + jnp.einsum("bth,hg->btg", yb, f32(fp["w_ih_from_b"]))
                     + fp["bias"])
            pre_b = (jnp.einsum("bth,hg->btg", yf, f32(bp["w_ih_from_f"]))
                     + jnp.einsum("bth,hg->btg", yb, f32(bp["w_ih_from_b"]))
                     + bp["bias"])
        yf = run_dir(pre_f, fp["w_hh_t"], reverse=False)
        yb = run_dir(pre_b, bp["w_hh_t"], reverse=True)

    return (jnp.einsum("bth,ho->bto", yf, f32(params["fc_w_f"]))
            + jnp.einsum("bth,ho->bto", yb, f32(params["fc_w_b"]))
            + params["fc_b"])


if __name__ == "__main__":
    B, T = 2, 8
    input_size, hidden_size, output_size = 16, 32, 8
    num_layers = 2

    key = jax.random.PRNGKey(0)
    kp, kx = jax.random.split(key)

    params = init_params(kp, input_size, hidden_size, output_size, num_layers)
    input_seq = jax.random.normal(kx, (B, T, input_size), jnp.float32)
    input_lengths = jnp.array([T, T - 3], dtype=jnp.int32)

    out = autoregressive_encoder_forward(params, input_seq, input_lengths)
    jax.block_until_ready(out)

    # pad_packed_sequence pads only up to the longest sequence in the batch.
    max_len = int(jnp.max(input_lengths))
    out = out[:, :max_len, :]

    assert out.shape == (B, max_len, output_size)
    assert bool(jnp.all(jnp.isfinite(out)))

    ref = _reference_forward(params, input_seq, input_lengths)[:, :max_len, :]
    err = float(jnp.max(jnp.abs(out - ref)))
    # bf16 operands / HBM intermediates; h/c state and matmul accumulation in f32.
    assert err < 3e-2, f"max abs error vs reference: {err}"

    print("KERNEL_OK")
</pallas_src>

<mosaic_0001>
module attributes {stable_mosaic.version = 11 : i64} {
  func.func @_proj_in_kernel(%arg0: i32, %arg1: i32, %arg2: memref<16x16xbf16, #tpu.memory_space<vmem>>, %arg3: memref<16x64xbf16, #tpu.memory_space<vmem>>, %arg4: memref<16x64xbf16, #tpu.memory_space<vmem>>, %arg5: memref<1x64xf32, #tpu.memory_space<vmem>>, %arg6: memref<1x64xf32, #tpu.memory_space<vmem>>, %arg7: memref<16x64xbf16, #tpu.memory_space<vmem>>, %arg8: memref<16x64xbf16, #tpu.memory_space<vmem>>) attributes {dimension_semantics = [#tpu.dimension_semantics<parallel>, #tpu.dimension_semantics<parallel>], iteration_bounds = array<i64: 1, 1>, scalar_prefetch = 0 : i64, scratch_operands = 0 : i64, tpu.core_type = #tpu.core_type<tc>, window_params = [{transform_indices = @transform_0, window_bounds = array<i64: 16, 16>}, {transform_indices = @transform_1, window_bounds = array<i64: 16, 64>}, {transform_indices = @transform_2, window_bounds = array<i64: 16, 64>}, {transform_indices = @transform_3, window_bounds = array<i64: 1, 64>}, {transform_indices = @transform_4, window_bounds = array<i64: 1, 64>}, {transform_indices = @transform_5, window_bounds = array<i64: 16, 64>}, {transform_indices = @transform_6, window_bounds = array<i64: 16, 64>}]} {
    %c0 = arith.constant 0 : index
    %c0_0 = arith.constant 0 : index
    %0 = vector.load %arg2[%c0, %c0_0] : memref<16x16xbf16, #tpu.memory_space<vmem>>, vector<16x16xbf16>
    %c0_1 = arith.constant 0 : index
    %c0_2 = arith.constant 0 : index
    %1 = vector.load %arg3[%c0_1, %c0_2] : memref<16x64xbf16, #tpu.memory_space<vmem>>, vector<16x64xbf16>
    %cst = arith.constant dense<0.000000e+00> : vector<16x64xf32>
    %2 = tpu.matmul %0, %1, %cst {dimension_numbers = #tpu.dot_dimension_numbers<[1], [0], [0], [1], [0, 0, 1, 1], [], []>} : vector<16x16xbf16>, vector<16x64xbf16>, vector<16x64xf32> -> vector<16x64xf32>
    %c0_3 = arith.constant 0 : index
    %c0_4 = arith.constant 0 : index
    %3 = vector.load %arg5[%c0_3, %c0_4] : memref<1x64xf32, #tpu.memory_space<vmem>>, vector<1x64xf32>
    %4 = vector.broadcast %3 : vector<1x64xf32> to vector<16x64xf32>
    %5 = arith.addf %2, %4 : vector<16x64xf32>
    %c0_5 = arith.constant 0 : index
    %c0_6 = arith.constant 0 : index
    %6 = vector.load %arg4[%c0_5, %c0_6] : memref<16x64xbf16, #tpu.memory_space<vmem>>, vector<16x64xbf16>
    %cst_7 = arith.constant dense<0.000000e+00> : vector<16x64xf32>
    %7 = tpu.matmul %0, %6, %cst_7 {dimension_numbers = #tpu.dot_dimension_numbers<[1], [0], [0], [1], [0, 0, 1, 1], [], []>} : vector<16x16xbf16>, vector<16x64xbf16>, vector<16x64xf32> -> vector<16x64xf32>
    %c0_8 = arith.constant 0 : index
    %c0_9 = arith.constant 0 : index
    %8 = vector.load %arg6[%c0_8, %c0_9] : memref<1x64xf32, #tpu.memory_space<vmem>>, vector<1x64xf32>
    %9 = vector.broadcast %8 : vector<1x64xf32> to vector<16x64xf32>
    %10 = arith.addf %7, %9 : vector<16x64xf32>
    %11 = arith.truncf %5 : vector<16x64xf32> to vector<16x64xbf16>
    %c0_10 = arith.constant 0 : index
    %c0_11 = arith.constant 0 : index
    %12 = vector.load %arg7[%c0_10, %c0_11] : memref<16x64xbf16, #tpu.memory_space<vmem>>, vector<16x64xbf16>
    tpu.vector_store %arg7[%c0_10, %c0_11], %11 {strides = array<i32>} : memref<16x64xbf16, #tpu.memory_space<vmem>>, vector<16x64xbf16>,
    %13 = arith.truncf %10 : vector<16x64xf32> to vector<16x64xbf16>
    %c0_12 = arith.constant 0 : index
    %c0_13 = arith.constant 0 : index
    %14 = vector.load %arg8[%c0_12, %c0_13] : memref<16x64xbf16, #tpu.memory_space<vmem>>, vector<16x64xbf16>
    tpu.vector_store %arg8[%c0_12, %c0_13], %13 {strides = array<i32>} : memref<16x64xbf16, #tpu.memory_space<vmem>>, vector<16x64xbf16>,
    return
  }
  func.func @transform_0(%arg0: i32, %arg1: i32) -> (i32, i32) {
    %c0_i32 = arith.constant 0 : i32
    %c0_i32_0 = arith.constant 0 : i32
    return %arg0, %c0_i32 : i32, i32
  }
  func.func @transform_1(%arg0: i32, %arg1: i32) -> (i32, i32) {
    %c0_i32 = arith.constant 0 : i32
    %c0_i32_0 = arith.constant 0 : i32
    return %c0_i32, %arg1 : i32, i32
  }
  func.func @transform_2(%arg0: i32, %arg1: i32) -> (i32, i32) {
    %c0_i32 = arith.constant 0 : i32
    %c0_i32_0 = arith.constant 0 : i32
    return %c0_i32, %arg1 : i32, i32
  }
  func.func @transform_3(%arg0: i32, %arg1: i32) -> (i32, i32) {
    %c0_i32 = arith.constant 0 : i32
    %c0_i32_0 = arith.constant 0 : i32
    return %c0_i32, %arg1 : i32, i32
  }
  func.func @transform_4(%arg0: i32, %arg1: i32) -> (i32, i32) {
    %c0_i32 = arith.constant 0 : i32
    %c0_i32_0 = arith.constant 0 : i32
    return %c0_i32, %arg1 : i32, i32
  }
  func.func @transform_5(%arg0: i32, %arg1: i32) -> (i32, i32) {
    %c0_i32 = arith.constant 0 : i32
    return %arg0, %arg1 : i32, i32
  }
  func.func @transform_6(%arg0: i32, %arg1: i32) -> (i32, i32) {
    %c0_i32 = arith.constant 0 : i32
    return %arg0, %arg1 : i32, i32
  }
}

</mosaic_0001>

<llo_original>
// kernel: tpu_custom_call.1
$region0: #{tpu_custom_call.1}
  #allocation0 [shape = 'u32[]', space=smem, size = 0x4, offset = 0x4, fixed_abs, tag = 'smem constant byte address 0x4 - core index']
  #allocation1 [shape = 'u32[72,128]{1,0:T(1,128)}', space=vmem, size = 0x9000, scoped, tag = 'internal scratch']
  %s0 = inlined_call_operand.hbm [shape: bf16[16,16], index: 0, kind: input, shape index: {}]
  %s1 = inlined_call_operand.hbm [shape: bf16[16,64], index: 1, kind: input, shape index: {}]
  %s2 = inlined_call_operand.hbm [shape: bf16[16,64], index: 2, kind: input, shape index: {}]
  %s3 = inlined_call_operand.vmem [shape: f32[1,64], index: 3, kind: input, shape index: {}]
  %s4 = inlined_call_operand.vmem [shape: f32[1,64], index: 4, kind: input, shape index: {}]
  %s5 = inlined_call_operand.hbm [shape: bf16[16,64], index: 5, kind: output, shape index: {0}]
  %s6 = inlined_call_operand.hbm [shape: bf16[16,64], index: 6, kind: output, shape index: {1}]
  %7 = xla_tuple %s5, %s6
  %s8 = sld [smem:[#allocation0]]
  $region50: #{tpu_custom_call.1} parent=0
    _
  %s10 = ssub.s32 1, %s8
  %s11 = scalar_select 0, %s10, %s8
  $region1: #{tpu_custom_call.1} parent=0
    #allocation2 [shape = 'u8[4096]{0}', space=vmem, size = 0x1000, scoped, tag = 'input window, operand 0, single buffered']
    #allocation3 [shape = 's32[1]{0}', space=sflag, size = 0x4, scoped, tag = 'scoped memory for tpu_custom_call.1']
    #allocation4 [shape = 's32[1]{0}', space=sflag, size = 0x4, scoped, tag = 'scoped memory for tpu_custom_call.1']
    #allocation5 [shape = 'u8[4096]{0}', space=vmem, size = 0x1000, scoped, tag = 'input window, operand 1, single buffered']
    #allocation6 [shape = 's32[1]{0}', space=sflag, size = 0x4, scoped, tag = 'scoped memory for tpu_custom_call.1']
    #allocation7 [shape = 'u8[4096]{0}', space=vmem, size = 0x1000, scoped, tag = 'input window, operand 2, single buffered']
    #allocation8 [shape = 'u8[4096]{0}', space=vmem, size = 0x1000, scoped, tag = 'output window, operand 0, single buffered']
    #allocation9 [shape = 'u8[4096]{0}', space=vmem, size = 0x1000, scoped, tag = 'output window, operand 1, single buffered']
    #allocation10 [shape = 's32[1]{0}', space=sflag, size = 0x4, scoped, tag = 'scoped memory for tpu_custom_call.1']
    %12 = vsyncpa [#allocation3], 0
    %13 = vsyncpa [#allocation6], 0
    %14 = vsyncpa [#allocation4], 0
    %15 = vsyncpa [#allocation10], 0
    // Predicated region
    $region2: #{tpu_custom_call.1} parent=1 // pred_check
      _
    $region3: #{tpu_custom_call.1} parent=1 // pred_check_branch
      %17 = sbr.rel (0) target = $region5
    $region4: #{tpu_custom_call.1} parent=1 // pred_region
      %19 = vsyncadd [#allocation3], 0
      %s20 = sshll.u32 %s0, 4
      %s21 = int_to_ptr.hbm [resolvable:$true] %s20
      %s22 = sshll.u32 [#allocation2], 4
      %s23 = int_to_ptr.vmem [resolvable:$true] %s22
      %28 = dma.hbm_to_vmem [thread:$0]  %s21, 128, %s23, [#allocation3], 64, 64, 4
    $region5: #{tpu_custom_call.1} parent=1 // pred_fallthru
      _
    // Predicated region
    $region6: #{tpu_custom_call.1} parent=1 // pred_check
      _
    $region7: #{tpu_custom_call.1} parent=1 // pred_check_branch
      %30 = sbr.rel (0) target = $region9
    $region8: #{tpu_custom_call.1} parent=1 // pred_region
      %32 = vsyncadd [#allocation6], 0
      %s33 = sshll.u32 %s1, 4
      %s34 = int_to_ptr.hbm [resolvable:$true] %s33
      %s35 = sshll.u32 [#allocation5], 4
      %s36 = int_to_ptr.vmem [resolvable:$true] %s35
      %41 = dma.hbm_to_vmem [thread:$0]  %s34, 128, %s36, [#allocation6], 64, 64, 4
    $region9: #{tpu_custom_call.1} parent=1 // pred_fallthru
      _
    // Predicated region
    $region10: #{tpu_custom_call.1} parent=1 // pred_check
      _
    $region11: #{tpu_custom_call.1} parent=1 // pred_check_branch
      %43 = sbr.rel (0) target = $region13
    $region12: #{tpu_custom_call.1} parent=1 // pred_region
      %45 = vsyncadd [#allocation6], 0
      %s46 = sshll.u32 %s2, 4
      %s47 = int_to_ptr.hbm [resolvable:$true] %s46
      %s48 = sshll.u32 [#allocation7], 4
      %s49 = int_to_ptr.vmem [resolvable:$true] %s48
      %54 = dma.hbm_to_vmem [thread:$0]  %s47, 128, %s49, [#allocation6], 64, 64, 4
    $region13: #{tpu_custom_call.1} parent=1 // pred_fallthru
      _
    // Predicated region
    $region14: #{tpu_custom_call.1} parent=1 // pred_check
      _
    $region15: #{tpu_custom_call.1} parent=1 // pred_check_branch
      %56 = sbr.rel (0) target = $region17
    $region16: #{tpu_custom_call.1} parent=1 // pred_region
      _
    $region17: #{tpu_custom_call.1} parent=1 // pred_fallthru
      _
    // Predicated region
    $region18: #{tpu_custom_call.1} parent=1 // pred_check
      _
    $region19: #{tpu_custom_call.1} parent=1 // pred_check_branch
      %58 = sbr.rel (0) target = $region21
    $region20: #{tpu_custom_call.1} parent=1 // pred_region
      _
    $region21: #{tpu_custom_call.1} parent=1 // pred_fallthru
      _
    // Predicated region
    $region22: #{tpu_custom_call.1} parent=1 // pred_check
      _
    $region23: #{tpu_custom_call.1} parent=1 // pred_check_branch
      %60 = sbr.rel (0) target = $region25
    $region24: #{tpu_custom_call.1} parent=1 // pred_region
      %62 = dma.done [#allocation3], 128
    $region25: #{tpu_custom_call.1} parent=1 // pred_fallthru
      _
    // Predicated region
    $region26: #{tpu_custom_call.1} parent=1 // pred_check
      _
    $region27: #{tpu_custom_call.1} parent=1 // pred_check_branch
      %64 = sbr.rel (0) target = $region29
    $region28: #{tpu_custom_call.1} parent=1 // pred_region
      %66 = dma.done [#allocation6], 128
    $region29: #{tpu_custom_call.1} parent=1 // pred_fallthru
      _
    // Predicated region
    $region30: #{tpu_custom_call.1} parent=1 // pred_check
      _
    $region31: #{tpu_custom_call.1} parent=1 // pred_check_branch
      %68 = sbr.rel (0) target = $region33
    $region32: #{tpu_custom_call.1} parent=1 // pred_region
      %70 = dma.done [#allocation6], 128
    $region33: #{tpu_custom_call.1} parent=1 // pred_fallthru
      _
    %v72 = vld [vmem:[#allocation2] sm:$0xf]
    %v73 = vld [vmem:[#allocation2 + $0x4] sm:$0xf]
    %v74 = vld [vmem:[#allocation5] sm:$0xf]
    %v75 = vld [vmem:[#allocation5 + $0x4] sm:$0xf]
    %v76 = vld [vmem:[%s3] sm:$0x1]
    %v78 = vperm.slane %v76, 0
    %v82 = vunpack.c.l.b16 %v72
    %v83 = vunpack.c.l.b16 %v73
    %v84 = vpack.c.b16 %v83, %v82
    %v87 = vunpack.c.l.b16 %v74
    %v88 = vunpack.c.l.b16 %v75
    %v89 = vpack.c.b16 %v88, %v87
    %vm91 = vcmask 130048
    %v93 = vsel %vm91, %v84, 0
    %95 = vmatpush.bf16.msra.mxu0 0
    %96 = vmatpush.bf16.msra.mxu0 0
    %97 = vmatpush.bf16.msra.mxu0 0
    %98 = vmatpush.bf16.msra.mxu0 0
    %99 = vmatpush.bf16.msra.mxu0 0
    %100 = vmatpush.bf16.msra.mxu0 0
    %101 = vmatpush.bf16.msra.mxu0 0
    %102 = vmatpush.bf16.msra.mxu0 %v89
    %103 = vmatmul.bf16.gmra.mxu0 %v93
    %v104 = vpop.f32.mrf.mxu0
    %v105 = vadd.f32 %v78, %v104
    %v106 = vpop.f32.mrf.mxu0
    %v107 = vadd.f32 %v78, %v106
    %108 = vdwg.mxu0
    %v109 = vld [vmem:[#allocation7] sm:$0xf]
    %v110 = vld [vmem:[#allocation7 + $0x4] sm:$0xf]
    %v111 = vld [vmem:[%s4] sm:$0x1]
    %v113 = vperm.slane %v111, 0
    %v117 = vunpack.c.l.b16 %v109
    %v118 = vunpack.c.l.b16 %v110
    %v119 = vpack.c.b16 %v118, %v117
    %121 = vmatpush.bf16.msra.mxu0 0
    %122 = vmatpush.bf16.msra.mxu0 0
    %123 = vmatpush.bf16.msra.mxu0 0
    %124 = vmatpush.bf16.msra.mxu0 0
    %125 = vmatpush.bf16.msra.mxu0 0
    %126 = vmatpush.bf16.msra.mxu0 0
    %127 = vmatpush.bf16.msra.mxu0 0
    %128 = vmatpush.bf16.msra.mxu0 %v119
    %129 = vmatmul.bf16.gmra.mxu0 %v93
    %v130 = vpop.f32.mrf.mxu0
    %v131 = vadd.f32 %v113, %v130
    %v132 = vpop.f32.mrf.mxu0
    %v133 = vadd.f32 %v113, %v132
    %134 = vdwg.mxu0
    %v135 = vpack.c.bf16 %v105, %v105
    %v136 = vpack.c.bf16 %v107, %v107
    %vm137 = vcmask 519168
    %138 = vst.msk [vmem:[#allocation8] sm:$0xf] %vm137, %v135
    %139 = vst.msk [vmem:[#allocation8 + $0x4] sm:$0xf] %vm137, %v136
    %v140 = vpack.c.bf16 %v131, %v131
    %v141 = vpack.c.bf16 %v133, %v133
    %142 = vst.msk [vmem:[#allocation9] sm:$0xf] %vm137, %v140
    %143 = vst.msk [vmem:[#allocation9 + $0x4] sm:$0xf] %vm137, %v141
    // Predicated region
    $region34: #{tpu_custom_call.1} parent=1 // pred_check
      _
    $region35: #{tpu_custom_call.1} parent=1 // pred_check_branch
      %145 = sbr.rel (0) target = $region37
    $region36: #{tpu_custom_call.1} parent=1 // pred_region
      %147 = vsyncadd [#allocation4], 0
      %s148 = sshll.u32 [#allocation8], 4
      %s149 = int_to_ptr.vmem [resolvable:$true] %s148
      %s150 = sshll.u32 %s5, 4
      %s151 = int_to_ptr.hbm [resolvable:$true] %s150
      %156 = dma.vmem_to_hbm [thread:$0]  %s149, 128, %s151, [#allocation4], 64, 64, 4
    $region37: #{tpu_custom_call.1} parent=1 // pred_fallthru
      _
    // Predicated region
    $region38: #{tpu_custom_call.1} parent=1 // pred_check
      _
    $region39: #{tpu_custom_call.1} parent=1 // pred_check_branch
      %158 = sbr.rel (0) target = $region41
    $region40: #{tpu_custom_call.1} parent=1 // pred_region
      %160 = vsyncadd [#allocation10], 0
      %s161 = sshll.u32 [#allocation9], 4
      %s162 = int_to_ptr.vmem [resolvable:$true] %s161
      %s163 = sshll.u32 %s6, 4
      %s164 = int_to_ptr.hbm [resolvable:$true] %s163
      %169 = dma.vmem_to_hbm [thread:$0]  %s162, 128, %s164, [#allocation10], 64, 64, 4
    $region41: #{tpu_custom_call.1} parent=1 // pred_fallthru
      _
    // Predicated region
    $region42: #{tpu_custom_call.1} parent=1 // pred_check
      _
    $region43: #{tpu_custom_call.1} parent=1 // pred_check_branch
      %171 = sbr.rel (0) target = $region45
    $region44: #{tpu_custom_call.1} parent=1 // pred_region
      %173 = dma.done [#allocation4], 128
    $region45: #{tpu_custom_call.1} parent=1 // pred_fallthru
      _
    // Predicated region
    $region46: #{tpu_custom_call.1} parent=1 // pred_check
      _
    $region47: #{tpu_custom_call.1} parent=1 // pred_check_branch
      %175 = sbr.rel (0) target = $region49
    $region48: #{tpu_custom_call.1} parent=1 // pred_region
      %177 = dma.done [#allocation10], 128
    $region49: #{tpu_custom_call.1} parent=1 // pred_fallthru
      _
    %178 = vsyncpa [#allocation3], 1
    %179 = vsyncpa [#allocation6], 1
    %180 = vsyncpa [#allocation4], 1
    %181 = vsyncpa [#allocation10], 1

</llo_original>
